<compile_context>
chip_gen: v7x
topology: tpu7x:2x2x1
jax: 0.10.0
libtpu: 0.0.40
codegen_flags: <defaults>
</compile_context>

<pallas_src>
import functools

import jax
import jax.numpy as jnp
from jax import lax
from jax.experimental import pallas as pl
from jax.experimental.pallas import tpu as pltpu

_MIB = 1024 * 1024


def _round_up(v, m):
    return (v + m - 1) // m * m


def _vmem_capacity_bytes():
    try:
        cap = getattr(pltpu.get_tpu_info(), "vmem_capacity_bytes", None)
        if cap:
            return int(cap)
    except Exception:
        pass
    return 64 * _MIB  # conservative default (v7x: 64 MiB per TensorCore)


def _pick_tile_d(d_p, n_p, requested_td, vmem_cap):
    """Largest lane tile dividing d_p; prefers 256-multiples; fits VMEM budget."""
    # Per-tile budget ~1/10 of VMEM (~12.8 MiB on 128 MiB v5e/v6e, ~6.4 MiB on
    # 64 MiB v7x); 16 B/element ~= f32 * (2 input + 2 output pipeline buffers),
    # leaving the remaining 9/10 for the resident one-hot and f32 temporaries.
    budget = max(4 * _MIB, vmem_cap // 10)
    cap = max(128, (budget // (16 * n_p)) // 128 * 128)
    cap = min(cap, max(128, _round_up(requested_td, 128)), d_p)
    best256, best128 = 0, 128
    for cand in range(128, cap + 1, 128):
        if d_p % cand == 0:
            best128 = cand
            if cand % 256 == 0:       # v6e/v7x MXU is 2x256x256
                best256 = cand
    return best256 or best128


def _instance_norm_kernel(one_hot_ref, inv_cnt_ref, x_ref, o_ref, *,
                          eps, subtract_mean):
    x = x_ref[...].astype(jnp.float32)            # [Np, TD]
    one_hot = one_hot_ref[...]                    # [Np, Gp] f32 {0,1}, resident
    inv_cnt = inv_cnt_ref[...]                    # [Gp, 1]  1/max(count,1), resident

    def seg_mean(v):                              # [Np, K] -> per-graph mean [Gp, K]
        s = lax.dot_general(one_hot, v,
                            dimension_numbers=(((0,), (0,)), ((), ())),
                            preferred_element_type=jnp.float32)
        return s * inv_cnt                        # exact divide, O(Gp*K) VPU

    def gather(g):                                # [Gp, K] -> per-node rows [Np, K]
        return jnp.dot(one_hot, g, preferred_element_type=jnp.float32)

    # Faithful to the PyTorch forward: mean subtracted only when
    # subtract_mean is False.
    if not subtract_mean:
        x = x - gather(seg_mean(x))

    # Graph-level rsqrt (Gp*TD transcendentals instead of Np*TD), then gather.
    inv_std = lax.rsqrt(seg_mean(x * x) + eps)    # [Gp, TD]
    o_ref[...] = (x * gather(inv_std)).astype(o_ref.dtype)


def _layer_apply_kernel(*refs, center):
    # refs = (mu, inv_std, x, o) when centering, else (inv_std, x, o).
    if center:
        mu_ref, inv_std_ref, x_ref, o_ref = refs
    else:
        inv_std_ref, x_ref, o_ref = refs
    x = x_ref[...].astype(jnp.float32)
    if center:
        x = x - mu_ref[...]                       # [Np,1] lane-broadcast
    o_ref[...] = (x * inv_std_ref[...]).astype(o_ref.dtype)


def non_batch_norm(x, batch, num_graphs, *, mode='instance',
                   subtract_mean=True, eps=1e-7, tile_d=1024):
    assert mode in ('layer', 'instance')
    assert eps > 0.0
    n, d = x.shape

    vmem_cap = _vmem_capacity_bytes()
    vmem_limit = int(min(vmem_cap * 3 // 4, 112 * _MIB))

    n_p = _round_up(max(n, 1), 8)
    d_p = _round_up(max(d, 1), 128)
    td = _pick_tile_d(d_p, n_p, tile_d, vmem_cap)
    # NOTE(v7x): when the device has 2 TensorCores and d_p permits >=2 tiles,
    # the single "parallel" axis shards across both cores.
    grid = (d_p // td,)
    x_p = jnp.pad(x, ((0, n_p - n), (0, d_p - d)))
    bi = batch.astype(jnp.int32)

    if mode == 'instance':
        # Hoisted once into the wrapper (previously rebuilt every grid step):
        # lane-dense one-hot membership + exact inverse counts.  Padded graphs
        # have count 0 and are never selected; padded node rows are all zeros.
        g_p = _round_up(max(int(num_graphs), 1), 128)
        one_hot = (bi[:, None] == jnp.arange(g_p, dtype=jnp.int32)[None, :]
                   ).astype(jnp.float32)                          # [n, g_p]
        one_hot = jnp.pad(one_hot, ((0, n_p - n), (0, 0)))        # [n_p, g_p]
        counts = jnp.sum(one_hot, axis=0)                         # [g_p]
        inv_counts = (1.0 / jnp.maximum(counts, 1.0)).reshape(g_p, 1)

        # TODO(synk): gate the resident one-hot on n_p*g_p*4 bytes fitting VMEM
        # and fall back to an N-tiled two-phase accumulate/apply kernel.
        kernel = functools.partial(_instance_norm_kernel, eps=float(eps),
                                   subtract_mean=bool(subtract_mean))
        out_p = pl.pallas_call(
            kernel,
            out_shape=jax.ShapeDtypeStruct((n_p, d_p), x.dtype),
            grid=grid,
            in_specs=[pl.BlockSpec((n_p, g_p), lambda j: (0, 0)),   # resident
                      pl.BlockSpec((g_p, 1), lambda j: (0, 0)),     # resident
                      pl.BlockSpec((n_p, td), lambda j: (0, j))],   # streamed
            out_specs=pl.BlockSpec((n_p, td), lambda j: (0, j)),
            compiler_params=pltpu.CompilerParams(
                dimension_semantics=("parallel",),
                vmem_limit_bytes=vmem_limit),
        )(one_hot, inv_counts, x_p)
        return out_p[:n, :d]

    # -------- 'layer' mode --------
    # Row statistics collapse to [N,1]/[G,1]; compute them in the wrapper
    # (tiny) so the Pallas kernel stays a D-tiled, double-buffered apply pass
    # instead of one full-D block that blows VMEM at moderate D.
    xf = x.astype(jnp.float32)

    def seg_mean_gather(v):                        # [n, 1] -> [n, 1]
        sums = jnp.zeros((num_graphs, v.shape[1]), jnp.float32).at[bi].add(v)
        cnt = jnp.zeros((num_graphs, 1), jnp.float32).at[bi].add(1.0)
        return (sums / jnp.maximum(cnt, 1.0))[bi]

    center = not subtract_mean
    if center:
        mu = seg_mean_gather(jnp.mean(xf, axis=-1, keepdims=True))  # [n, 1]
        xc = xf - mu
    else:
        mu = None
        xc = xf
    inv_std = lax.rsqrt(
        seg_mean_gather(jnp.mean(xc * xc, axis=-1, keepdims=True)) + float(eps))
    inv_std_p = jnp.pad(inv_std, ((0, n_p - n), (0, 0)))

    args, specs = [], []
    if center:
        args.append(jnp.pad(mu, ((0, n_p - n), (0, 0))))
        specs.append(pl.BlockSpec((n_p, 1), lambda j: (0, 0)))      # resident
    args += [inv_std_p, x_p]
    specs += [pl.BlockSpec((n_p, 1), lambda j: (0, 0)),             # resident
              pl.BlockSpec((n_p, td), lambda j: (0, j))]            # streamed

    kernel = functools.partial(_layer_apply_kernel, center=center)
    out_p = pl.pallas_call(
        kernel,
        out_shape=jax.ShapeDtypeStruct((n_p, d_p), x.dtype),
        grid=grid,
        in_specs=specs,
        out_specs=pl.BlockSpec((n_p, td), lambda j: (0, j)),
        compiler_params=pltpu.CompilerParams(
            dimension_semantics=("parallel",),
            vmem_limit_bytes=vmem_limit),
    )(*args)
    return out_p[:n, :d]


def _reference(x, batch, num_graphs, mode, subtract_mean, eps):
    """Pure-JAX reference of NonBatchNorm.forward."""
    def get_mean(v):
        if mode == 'layer':
            v = v.mean(axis=-1, keepdims=True)
        sums = jnp.zeros((num_graphs, v.shape[1]), v.dtype).at[batch].add(v)
        cnt = jnp.zeros((num_graphs, 1), v.dtype).at[batch].add(
            jnp.ones((v.shape[0], 1), v.dtype))
        means = sums / jnp.maximum(cnt, 1.0)
        return means[batch]

    if not subtract_mean:
        x = x - get_mean(x)
    mean_sq = get_mean(x * x)
    return x * lax.rsqrt(mean_sq + eps)


if __name__ == "__main__":
    key = jax.random.PRNGKey(0)
    N, D, G = 10, 40, 3                      # deliberately off (8,128) alignment
    kx, kb, k2 = jax.random.split(key, 3)
    x = jax.random.normal(kx, (N, D), dtype=jnp.float32)
    batch = jax.random.randint(kb, (N,), 0, G, dtype=jnp.int32)
    batch = batch.at[0].set(0).at[1].set(1).at[2].set(2)   # every graph non-empty

    ok = True
    for mode in ('layer', 'instance'):
        for subtract_mean in (True, False):
            out = jax.block_until_ready(
                non_batch_norm(x, batch, G, mode=mode,
                               subtract_mean=subtract_mean, eps=1e-7))
            ref = _reference(x, batch, G, mode, subtract_mean, 1e-7)
            if not jnp.allclose(out, ref, rtol=1e-5, atol=1e-5):
                ok = False
                print(f"MISMATCH mode={mode} subtract_mean={subtract_mean} "
                      f"max_err={float(jnp.max(jnp.abs(out - ref)))}")

    # Exercise the multi-tile D grid (3 parallel tiles of 128 lanes each).
    x_big = jax.random.normal(k2, (N, 300), dtype=jnp.float32)
    for mode in ('layer', 'instance'):
        out = jax.block_until_ready(
            non_batch_norm(x_big, batch, G, mode=mode,
                           subtract_mean=False, eps=1e-7, tile_d=128))
        ref = _reference(x_big, batch, G, mode, False, 1e-7)
        if not jnp.allclose(out, ref, rtol=1e-5, atol=1e-5):
            ok = False
            print(f"MISMATCH tiled mode={mode} max_err="
                  f"{float(jnp.max(jnp.abs(out - ref)))}")

    if ok:
        print("KERNEL_OK")
</pallas_src>

<mosaic_0001>
module attributes {stable_mosaic.version = 11 : i64} {
  func.func @_layer_apply_kernel(%arg0: i32, %arg1: memref<16x1xf32, #tpu.memory_space<vmem>>, %arg2: memref<16x128xf32, #tpu.memory_space<vmem>>, %arg3: memref<16x128xf32, #tpu.memory_space<vmem>>) attributes {dimension_semantics = [#tpu.dimension_semantics<parallel>], iteration_bounds = array<i64: 1>, scalar_prefetch = 0 : i64, scratch_operands = 0 : i64, tpu.core_type = #tpu.core_type<tc>, window_params = [{pipeline_mode = #tpu.pipeline_mode<synchronous>, transform_indices = @transform_0, window_bounds = array<i64: 16, 1>}, {transform_indices = @transform_1, window_bounds = array<i64: 16, 128>}, {transform_indices = @transform_2, window_bounds = array<i64: 16, 128>}]} {
    %c0 = arith.constant 0 : index
    %c0_0 = arith.constant 0 : index
    %0 = vector.load %arg2[%c0, %c0_0] : memref<16x128xf32, #tpu.memory_space<vmem>>, vector<16x128xf32>
    %c0_1 = arith.constant 0 : index
    %c0_2 = arith.constant 0 : index
    %1 = vector.load %arg1[%c0_1, %c0_2] : memref<16x1xf32, #tpu.memory_space<vmem>>, vector<16x1xf32>
    %2 = vector.broadcast %1 : vector<16x1xf32> to vector<16x128xf32>
    %3 = arith.mulf %0, %2 : vector<16x128xf32>
    %c0_3 = arith.constant 0 : index
    %c0_4 = arith.constant 0 : index
    %4 = vector.load %arg3[%c0_3, %c0_4] : memref<16x128xf32, #tpu.memory_space<vmem>>, vector<16x128xf32>
    tpu.vector_store %arg3[%c0_3, %c0_4], %3 {strides = array<i32>} : memref<16x128xf32, #tpu.memory_space<vmem>>, vector<16x128xf32>,
    return
  }
  func.func @transform_0(%arg0: i32) -> (i32, i32) {
    %c0_i32 = arith.constant 0 : i32
    %c0_i32_0 = arith.constant 0 : i32
    %c0_i32_1 = arith.constant 0 : i32
    return %c0_i32, %c0_i32_0 : i32, i32
  }
  func.func @transform_1(%arg0: i32) -> (i32, i32) {
    %c0_i32 = arith.constant 0 : i32
    %c0_i32_0 = arith.constant 0 : i32
    return %c0_i32, %arg0 : i32, i32
  }
  func.func @transform_2(%arg0: i32) -> (i32, i32) {
    %c0_i32 = arith.constant 0 : i32
    %c0_i32_0 = arith.constant 0 : i32
    return %c0_i32, %arg0 : i32, i32
  }
}

</mosaic_0001>

<llo_original>
// kernel: tpu_custom_call.1
$region0: #{tpu_custom_call.1}
  #allocation0 [shape = 'u32[]', space=smem, size = 0x4, offset = 0x4, fixed_abs, tag = 'smem constant byte address 0x4 - core index']
  #allocation1 [shape = 'u32[144,128]{1,0:T(1,128)}', space=vmem, size = 0x12000, scoped, tag = 'internal scratch']
  %s0 = inlined_call_operand.vmem [shape: f32[16,1], index: 0, kind: input, shape index: {}]
  %s1 = inlined_call_operand.vmem [shape: f32[16,128], index: 1, kind: input, shape index: {}]
  %s2 = inlined_call_operand.hbm [shape: f32[16,128], index: 2, kind: output, shape index: {}]
  %s3 = sld [smem:[#allocation0]]
  $region18: #{tpu_custom_call.1} parent=0
    _
  %s5 = ssub.s32 1, %s3
  %s6 = scalar_select 0, %s5, %s3
  $region1: #{tpu_custom_call.1} parent=0
    #allocation2 [shape = 'u8[8192]{0}', space=vmem, size = 0x2000, scoped, tag = 'output window, operand 0, single buffered']
    #allocation3 [shape = 's32[1]{0}', space=sflag, size = 0x4, scoped, tag = 'scoped memory for tpu_custom_call.1']
    %7 = vsyncpa [#allocation3], 0
    // Predicated region
    $region2: #{tpu_custom_call.1} parent=1 // pred_check
      _
    $region3: #{tpu_custom_call.1} parent=1 // pred_check_branch
      %9 = sbr.rel (0) target = $region5
    $region4: #{tpu_custom_call.1} parent=1 // pred_region
      _
    $region5: #{tpu_custom_call.1} parent=1 // pred_fallthru
      _
    // Predicated region
    $region6: #{tpu_custom_call.1} parent=1 // pred_check
      _
    $region7: #{tpu_custom_call.1} parent=1 // pred_check_branch
      %11 = sbr.rel (0) target = $region9
    $region8: #{tpu_custom_call.1} parent=1 // pred_region
      _
    $region9: #{tpu_custom_call.1} parent=1 // pred_fallthru
      _
    %v12 = vld [vmem:[%s1] sm:$0xff]
    %v13 = vld [vmem:[%s1 + $0x8] sm:$0xff]
    %v14 = vld [vmem:[%s0] sm:$0xff]
    %v15 = vld [vmem:[%s0 + $0x8] sm:$0xff]
    %17 = vset.pattern.permute.xlu0 0
    %18 = vperm.xlu0 %17, %v14
    %v19 = vpop.permute.xlu0 %18
    %22 = vset.pattern.permute.xlu0 0
    %23 = vperm.xlu0 %22, %v15
    %v24 = vpop.permute.xlu0 %23
    %v26 = vmul.f32 %v12, %v19
    %v27 = vmul.f32 %v13, %v24
    %28 = vst [vmem:[#allocation2] sm:$0xff] %v26
    %29 = vst [vmem:[#allocation2 + $0x8] sm:$0xff] %v27
    // Predicated region
    $region10: #{tpu_custom_call.1} parent=1 // pred_check
      _
    $region11: #{tpu_custom_call.1} parent=1 // pred_check_branch
      %31 = sbr.rel (0) target = $region13
    $region12: #{tpu_custom_call.1} parent=1 // pred_region
      %s33 = ssub.s32 256, 256
      %34 = vsyncadd [#allocation3], %s33
      %s35 = sshll.u32 [#allocation2], 4
      %s36 = int_to_ptr.vmem [resolvable:$true] %s35
      %41 = dma.vmem_to_hbm [thread:$0]  %s36, 256, %s2, [#allocation3], 128, 128, 8
    $region13: #{tpu_custom_call.1} parent=1 // pred_fallthru
      _
    // Predicated region
    $region14: #{tpu_custom_call.1} parent=1 // pred_check
      _
    $region15: #{tpu_custom_call.1} parent=1 // pred_check_branch
      %43 = sbr.rel (0) target = $region17
    $region16: #{tpu_custom_call.1} parent=1 // pred_region
      %44 = dma.done [#allocation3], 256
    $region17: #{tpu_custom_call.1} parent=1 // pred_fallthru
      _
    %45 = vsyncpa [#allocation3], 1

</llo_original>
